<compile_context>
chip_gen: v7x
topology: tpu7x:2x2x1
jax: 0.10.0
libtpu: 0.0.40
codegen_flags: <defaults>
</compile_context>

<pallas_src>
import functools
import math

import jax
import jax.numpy as jnp
from jax.experimental import pallas as pl
from jax.experimental.pallas import tpu as pltpu


def _default_vmem_limit():
    """Generation-aware scoped-VMEM budget: ~3/4 of physical, capped at 96 MiB."""
    cap = 128 * 1024 * 1024
    try:
        info = pltpu.get_tpu_info()
        cap = int(getattr(info, "vmem_capacity_bytes", cap))
    except Exception:
        pass
    return int(min(cap * 3 // 4, 96 * 1024 * 1024))


_VMEM_LIMIT = _default_vmem_limit()

# Attention scores are a returned diagnostic; set to jnp.bfloat16 on v5e to halve
# the dominant HBM store traffic at long S (kept f32 here to match the reference).
_SCORES_DTYPE = jnp.float32


def _row_tile(m):
    """Largest row tile (multiple of 16 preferred) that divides m, else full m."""
    for t in (1024, 512, 256, 128, 64, 32, 16):
        if m % t == 0:
            return t
    return m


def _col_tile(n):
    """Lane-dim tile for weight/output blocks (multiples of 128), else full n."""
    for t in (2048, 1024, 512, 256, 128):
        if n % t == 0:
            return t
    return n


def _q_tile(s):
    """Query-row tile for attention; bounds the (heads, tq, S) scores block."""
    for t in (256, 128, 64, 32, 16, 8):
        if s % t == 0:
            return t
    return s


def _layernorm_f32(x, alpha, beta, eps, d):
    # torch.std default is unbiased (ddof=1); eps added to std (not var), matching Norm.
    mu = jnp.mean(x, axis=-1, keepdims=True)
    var = jnp.sum((x - mu) ** 2, axis=-1, keepdims=True) / (d - 1)
    return alpha * (x - mu) / (jnp.sqrt(var) + eps) + beta


# ----------------------------- Pallas kernels ------------------------------

def _norm_linear_kernel(x_ref, a_ref, b_ref, w_ref, bias_ref, o_ref, *, eps, d, relu):
    """Fused LayerNorm (f32) -> matmul (bf16 operands, f32 acc) -> bias (+ReLU)."""
    xn = _layernorm_f32(x_ref[...], a_ref[...], b_ref[...], eps, d)
    y = jnp.dot(xn.astype(jnp.bfloat16), w_ref[...],
                preferred_element_type=jnp.float32)
    y = y + bias_ref[...]
    if relu:
        y = jnp.maximum(y, 0.0)
    o_ref[...] = y.astype(o_ref.dtype)


def norm_linear(x2d, alpha, beta, w_bf16, bias, *, relu=False,
                out_dtype=jnp.float32, eps=1e-6):
    M, K = x2d.shape
    N = w_bf16.shape[1]
    tm = _row_tile(M)
    tn = _col_tile(N)
    return pl.pallas_call(
        functools.partial(_norm_linear_kernel, eps=eps, d=K, relu=relu),
        out_shape=jax.ShapeDtypeStruct((M, N), out_dtype),
        grid=(M // tm, N // tn),
        in_specs=[pl.BlockSpec((tm, K), lambda i, j: (i, 0)),
                  pl.BlockSpec((1, K), lambda i, j: (0, 0)),
                  pl.BlockSpec((1, K), lambda i, j: (0, 0)),
                  pl.BlockSpec((K, tn), lambda i, j: (0, j)),
                  pl.BlockSpec((1, tn), lambda i, j: (0, j))],
        out_specs=pl.BlockSpec((tm, tn), lambda i, j: (i, j)),
        compiler_params=pltpu.CompilerParams(
            dimension_semantics=("parallel", "parallel"),
            vmem_limit_bytes=_VMEM_LIMIT),
    )(x2d, alpha, beta, w_bf16, bias)


def _linear_residual_kernel(x_ref, w_ref, bias_ref, r_ref, o_ref):
    """y = residual + x @ w + b  (bf16 MXU operands, f32 accumulation + residual)."""
    y = jnp.dot(x_ref[...].astype(jnp.bfloat16), w_ref[...],
                preferred_element_type=jnp.float32)
    o_ref[...] = r_ref[...] + y + bias_ref[...]


def linear_residual(x2d, w_bf16, bias, resid2d):
    M, K = x2d.shape
    N = w_bf16.shape[1]
    tm = _row_tile(M)
    tn = _col_tile(N)
    return pl.pallas_call(
        _linear_residual_kernel,
        out_shape=jax.ShapeDtypeStruct((M, N), jnp.float32),
        grid=(M // tm, N // tn),
        in_specs=[pl.BlockSpec((tm, K), lambda i, j: (i, 0)),
                  pl.BlockSpec((K, tn), lambda i, j: (0, j)),
                  pl.BlockSpec((1, tn), lambda i, j: (0, j)),
                  pl.BlockSpec((tm, tn), lambda i, j: (i, j))],
        out_specs=pl.BlockSpec((tm, tn), lambda i, j: (i, j)),
        compiler_params=pltpu.CompilerParams(
            dimension_semantics=("parallel", "parallel"),
            vmem_limit_bytes=_VMEM_LIMIT),
    )(x2d, w_bf16, bias, resid2d)


def _norm_kernel(x_ref, a_ref, b_ref, o_ref, *, eps, d):
    o_ref[...] = _layernorm_f32(x_ref[...], a_ref[...], b_ref[...], eps, d)


def layer_norm(x2d, alpha, bias, eps=1e-6):
    M, D = x2d.shape
    tm = _row_tile(M)
    return pl.pallas_call(
        functools.partial(_norm_kernel, eps=eps, d=D),
        out_shape=jax.ShapeDtypeStruct((M, D), jnp.float32),
        grid=(M // tm,),
        in_specs=[pl.BlockSpec((tm, D), lambda i: (i, 0)),
                  pl.BlockSpec((1, D), lambda i: (0, 0)),
                  pl.BlockSpec((1, D), lambda i: (0, 0))],
        out_specs=pl.BlockSpec((tm, D), lambda i: (i, 0)),
        compiler_params=pltpu.CompilerParams(
            dimension_semantics=("parallel",), vmem_limit_bytes=_VMEM_LIMIT),
    )(x2d, alpha, bias)


def _pe_kernel(x_ref, pe_ref, o_ref, *, scale):
    o_ref[...] = x_ref[...] * scale + pe_ref[...]


def apply_pe(x, pe_table, d_model):
    """x * sqrt(d_model) + PE, row-tiled over the flattened (B*S, D) stream."""
    B, S, D = x.shape
    x2d = x.reshape(B * S, D)
    ts = _row_tile(S)          # tile divides S -> blocks never cross a batch boundary
    n_s = S // ts
    out = pl.pallas_call(
        functools.partial(_pe_kernel, scale=math.sqrt(d_model)),
        out_shape=jax.ShapeDtypeStruct((B * S, D), jnp.float32),
        grid=(B * S // ts,),
        in_specs=[pl.BlockSpec((ts, D), lambda i: (i, 0)),
                  pl.BlockSpec((ts, D), lambda i: (i % n_s, 0))],
        out_specs=pl.BlockSpec((ts, D), lambda i: (i, 0)),
        compiler_params=pltpu.CompilerParams(
            dimension_semantics=("parallel",), vmem_limit_bytes=_VMEM_LIMIT),
    )(x2d, pe_table[:S])
    return out.reshape(B, S, D)


def _attn_kernel(q_ref, kv_ref, m_ref, wo_ref, bo_ref, xres_ref, o_ref, s_ref,
                 ctx_ref, *, heads, d_k, d_model, scale):
    """Fused multi-head attention + output projection + residual for one
    (batch, query-tile) grid step.

    q_ref   : (1, tq, 3D) bf16  (q columns used; row tile of the QKV stream)
    kv_ref  : (1, S, 3D)  bf16  (k/v columns used; block index constant over q-tiles)
    m_ref   : (1, 1, S)   f32   (1 = attend, 0 = masked)
    wo_ref  : (D, D)      bf16
    bo_ref  : (1, D)      f32
    xres_ref: (1, tq, D)  f32   residual stream
    o_ref   : (1, tq, D)  f32
    s_ref   : (1, heads, tq, S) attention scores (diagnostic output)
    ctx_ref : (tq, D)     bf16  VMEM scratch holding the per-head contexts
    """
    tq = q_ref.shape[1]
    S = kv_ref.shape[1]

    # Hoisted mask predicate/broadcast (shared by all heads of this grid step).
    neg = jnp.broadcast_to(m_ref[0] == 0.0, (tq, S))

    for h in range(heads):
        # 1/sqrt(d_k) folded into q (S*d_k mults instead of S*S per head).
        q = (q_ref[0, :, h * d_k:(h + 1) * d_k].astype(jnp.float32) * scale
             ).astype(jnp.bfloat16)
        k = kv_ref[0, :, d_model + h * d_k: d_model + (h + 1) * d_k]
        v = kv_ref[0, :, 2 * d_model + h * d_k: 2 * d_model + (h + 1) * d_k]

        # q @ k^T without an explicit transpose op (contract last dims).
        s = jax.lax.dot_general(q, k, (((1,), (1,)), ((), ())),
                                preferred_element_type=jnp.float32)
        s = jnp.where(neg, -1e9, s)              # masked_fill(mask == 0, -1e9)

        # Manual softmax: max/sub/exp on VPU+EUP, reciprocal-multiply (EUP slot).
        mx = jnp.max(s, axis=-1, keepdims=True)
        e = jnp.exp(s - mx)
        p = e * pl.reciprocal(jnp.sum(e, axis=-1, keepdims=True), approx=True)
        s_ref[0, h, :, :] = p.astype(s_ref.dtype)

        # Per-head context written into the (tq, D) scratch slice.
        ctx_ref[:, h * d_k:(h + 1) * d_k] = jnp.dot(
            p.astype(jnp.bfloat16), v,
            preferred_element_type=jnp.float32).astype(jnp.bfloat16)

    # One full-D out-projection matmul (full MXU contraction width) + residual.
    out = jnp.dot(ctx_ref[...], wo_ref[...], preferred_element_type=jnp.float32)
    o_ref[0] = xres_ref[0] + out + bo_ref[...]


def attention_block(qkv, mask, wo_bf16, bo, x_resid, heads,
                    scores_dtype=_SCORES_DTYPE):
    B, S, three_d = qkv.shape
    D = three_d // 3
    d_k = D // heads
    tq = _q_tile(S)
    out, scores = pl.pallas_call(
        functools.partial(_attn_kernel, heads=heads, d_k=d_k, d_model=D,
                          scale=1.0 / math.sqrt(d_k)),
        out_shape=(jax.ShapeDtypeStruct((B, S, D), jnp.float32),
                   jax.ShapeDtypeStruct((B, heads, S, S), scores_dtype)),
        grid=(B, S // tq),
        in_specs=[pl.BlockSpec((1, tq, three_d), lambda b, qi: (b, qi, 0)),  # q rows
                  pl.BlockSpec((1, S, three_d), lambda b, qi: (b, 0, 0)),    # full k/v
                  pl.BlockSpec((1, 1, S), lambda b, qi: (b, 0, 0)),
                  pl.BlockSpec((D, D), lambda b, qi: (0, 0)),
                  pl.BlockSpec((1, D), lambda b, qi: (0, 0)),
                  pl.BlockSpec((1, tq, D), lambda b, qi: (b, qi, 0))],
        out_specs=(pl.BlockSpec((1, tq, D), lambda b, qi: (b, qi, 0)),
                   pl.BlockSpec((1, heads, tq, S), lambda b, qi: (b, 0, qi, 0))),
        scratch_shapes=[pltpu.VMEM((tq, D), jnp.bfloat16)],
        compiler_params=pltpu.CompilerParams(
            dimension_semantics=("parallel", "parallel"),
            vmem_limit_bytes=_VMEM_LIMIT),
    )(qkv, qkv, mask, wo_bf16, bo, x_resid)
    return out, scores


# ------------------------------ model pieces -------------------------------

def encoder_layer(x, mask, p, heads):
    B, S, D = x.shape
    x2d = x.reshape(B * S, D)

    # Norm1 + fused QKV projection (bf16 output: matmul-only consumer).
    qkv = norm_linear(x2d, p["n1_a"], p["n1_b"], p["wqkv"], p["bqkv"],
                      out_dtype=jnp.bfloat16).reshape(B, S, 3 * D)

    # Attention + output projection + residual (dropout_1 identity, is_test).
    x, att_val = attention_block(qkv, mask, p["wo"], p["bo"], x, heads)

    # Norm2 + FFN1 + ReLU (bf16 hidden), then FFN2 + residual (dropout_2 identity).
    x2d = x.reshape(B * S, D)
    h = norm_linear(x2d, p["n2_a"], p["n2_b"], p["ff_w1"], p["ff_b1"],
                    relu=True, out_dtype=jnp.bfloat16)
    x = linear_residual(h, p["ff_w2"], p["ff_b2"], x2d).reshape(B, S, D)
    return x, att_val


def encoder_forward(src, mask, params, heads):
    B, S, D = src.shape
    x = apply_pe(src, params["pe"], D)
    mask = mask.astype(jnp.float32)
    att_val_enc = {}
    for i, lp in enumerate(params["layers"]):
        x, att_val = encoder_layer(x, mask, lp, heads)
        att_val_enc["layer" + str(i)] = att_val
    out = layer_norm(x.reshape(B * S, D),
                     params["norm_a"], params["norm_b"]).reshape(B, S, D)
    return out, att_val_enc


# ------------------------------ parameter init ------------------------------

def make_pe_table(max_frames, d_model):
    pos = jnp.arange(max_frames, dtype=jnp.float32)[:, None]
    j = jnp.arange(d_model, dtype=jnp.float32)[None, :]
    angle = pos / jnp.power(10000.0, 2.0 * j / d_model)
    return jnp.where((jnp.arange(d_model)[None, :] % 2) == 0,
                     jnp.sin(angle), jnp.cos(angle)).astype(jnp.float32)


def init_params(key, d_model, N, d_ff, max_frames):
    def dense(k, shape):
        return (0.05 * jax.random.normal(k, shape)).astype(jnp.float32)

    layers = []
    for li in range(N):
        ks = jax.random.split(jax.random.fold_in(key, li), 6)
        wq = dense(ks[0], (d_model, d_model))
        wk = dense(ks[1], (d_model, d_model))
        wv = dense(ks[2], (d_model, d_model))
        layers.append(dict(
            n1_a=jnp.ones((1, d_model), jnp.float32),
            n1_b=jnp.zeros((1, d_model), jnp.float32),
            n2_a=jnp.ones((1, d_model), jnp.float32),
            n2_b=jnp.zeros((1, d_model), jnp.float32),
            # fused QKV weight (D, 3D); MXU operands stored bf16 (f32 accumulation).
            wqkv=jnp.concatenate([wq, wk, wv], axis=1).astype(jnp.bfloat16),
            bqkv=jnp.zeros((1, 3 * d_model), jnp.float32),
            wo=dense(ks[3], (d_model, d_model)).astype(jnp.bfloat16),
            bo=jnp.zeros((1, d_model), jnp.float32),
            ff_w1=dense(ks[4], (d_model, d_ff)).astype(jnp.bfloat16),
            ff_b1=jnp.zeros((1, d_ff), jnp.float32),
            ff_w2=dense(ks[5], (d_ff, d_model)).astype(jnp.bfloat16),
            ff_b2=jnp.zeros((1, d_model), jnp.float32),
        ))
    return dict(
        pe=make_pe_table(max_frames, d_model),
        layers=layers,
        norm_a=jnp.ones((1, d_model), jnp.float32),
        norm_b=jnp.zeros((1, d_model), jnp.float32),
    )


# ----------------------------------- main -----------------------------------

if __name__ == "__main__":
    B, S, d_model, heads, N = 2, 8, 32, 4, 2
    d_ff = 64  # TODO(synk): repo FeedForward default is d_ff=2048; scaled down for the small test.
    max_frames = S

    key = jax.random.PRNGKey(0)
    k_src, k_par = jax.random.split(key)
    src = jax.random.normal(k_src, (B, S, d_model), dtype=jnp.float32)

    # mask: (B, 1, S), 1 = attend, 0 = masked (masked_fill(mask == 0, -1e9))
    mask = jnp.ones((B, 1, S), jnp.float32).at[1, 0, S - 1].set(0.0)

    params = init_params(k_par, d_model, N, d_ff, max_frames)

    out, att_val_enc = encoder_forward(src, mask, params, heads)
    out = jax.block_until_ready(out)
    for v in att_val_enc.values():
        jax.block_until_ready(v)

    assert out.shape == (B, S, d_model)
    assert att_val_enc["layer0"].shape == (B, heads, S, S)
    assert bool(jnp.all(jnp.isfinite(out)))
    for v in att_val_enc.values():
        assert bool(jnp.all(jnp.isfinite(v)))
    print("KERNEL_OK")
</pallas_src>

<mosaic_0001>
module attributes {stable_mosaic.version = 11 : i64} {
  func.func @_pe_kernel(%arg0: i32, %arg1: memref<8x32xf32, #tpu.memory_space<vmem>>, %arg2: memref<8x32xf32, #tpu.memory_space<vmem>>, %arg3: memref<8x32xf32, #tpu.memory_space<vmem>>) attributes {dimension_semantics = [#tpu.dimension_semantics<parallel>], iteration_bounds = array<i64: 2>, scalar_prefetch = 0 : i64, scratch_operands = 0 : i64, tpu.core_type = #tpu.core_type<tc>, window_params = [{transform_indices = @transform_0, window_bounds = array<i64: 8, 32>}, {transform_indices = @transform_1, window_bounds = array<i64: 8, 32>}, {transform_indices = @transform_2, window_bounds = array<i64: 8, 32>}]} {
    %c0 = arith.constant 0 : index
    %c0_0 = arith.constant 0 : index
    %0 = vector.load %arg1[%c0, %c0_0] : memref<8x32xf32, #tpu.memory_space<vmem>>, vector<8x32xf32>
    %cst = arith.constant 5.65685415 : f32
    %1 = vector.broadcast %cst : f32 to vector<8x32xf32>
    %2 = arith.mulf %0, %1 : vector<8x32xf32>
    %c0_1 = arith.constant 0 : index
    %c0_2 = arith.constant 0 : index
    %3 = vector.load %arg2[%c0_1, %c0_2] : memref<8x32xf32, #tpu.memory_space<vmem>>, vector<8x32xf32>
    %4 = arith.addf %2, %3 : vector<8x32xf32>
    %c0_3 = arith.constant 0 : index
    %c0_4 = arith.constant 0 : index
    %5 = vector.load %arg3[%c0_3, %c0_4] : memref<8x32xf32, #tpu.memory_space<vmem>>, vector<8x32xf32>
    tpu.vector_store %arg3[%c0_3, %c0_4], %4 {strides = array<i32>} : memref<8x32xf32, #tpu.memory_space<vmem>>, vector<8x32xf32>,
    return
  }
  func.func @transform_0(%arg0: i32) -> (i32, i32) {
    %c0_i32 = arith.constant 0 : i32
    %c0_i32_0 = arith.constant 0 : i32
    return %arg0, %c0_i32 : i32, i32
  }
  func.func @transform_1(%arg0: i32) -> (i32, i32) {
    %c1_i32 = arith.constant 1 : i32
    %c0_i32 = arith.constant 0 : i32
    %0 = arith.cmpi eq, %c1_i32, %c0_i32 : i32
    %c1_i32_0 = arith.constant 1 : i32
    %1 = arith.select %0, %c1_i32_0, %c1_i32 : i32
    %2 = arith.remsi %arg0, %1 : i32
    %c0_i32_1 = arith.constant 0 : i32
    %3 = arith.cmpi ne, %2, %c0_i32_1 : i32
    %c0_i32_2 = arith.constant 0 : i32
    %4 = arith.cmpi slt, %2, %c0_i32_2 : i32
    %c0_i32_3 = arith.constant 0 : i32
    %5 = arith.cmpi slt, %1, %c0_i32_3 : i32
    %6 = arith.xori %4, %5 : i1
    %7 = arith.andi %6, %3 : i1
    %8 = arith.addi %2, %1 : i32
    %9 = arith.select %7, %8, %2 : i32
    %c0_i32_4 = arith.constant 0 : i32
    %c0_i32_5 = arith.constant 0 : i32
    return %9, %c0_i32_4 : i32, i32
  }
  func.func @transform_2(%arg0: i32) -> (i32, i32) {
    %c0_i32 = arith.constant 0 : i32
    %c0_i32_0 = arith.constant 0 : i32
    return %arg0, %c0_i32 : i32, i32
  }
}

</mosaic_0001>

<llo_original>
// kernel: tpu_custom_call.1
$region0: #{tpu_custom_call.1}
  #allocation0 [shape = 'u32[]', space=smem, size = 0x4, offset = 0x4, fixed_abs, tag = 'smem constant byte address 0x4 - core index']
  #allocation1 [shape = 'u32[144,128]{1,0:T(1,128)}', space=vmem, size = 0x12000, scoped, tag = 'internal scratch']
  %s0 = inlined_call_operand.hbm [shape: f32[16,32], index: 0, kind: input, shape index: {}]
  %s1 = inlined_call_operand.hbm [shape: f32[8,32], index: 1, kind: input, shape index: {}]
  %s2 = inlined_call_operand.hbm [shape: f32[16,32], index: 2, kind: output, shape index: {}]
  %s3 = sld [smem:[#allocation0]]
  $region49: #{tpu_custom_call.1} parent=0
    _
  %s5 = ssub.s32 1, %s3
  %s6 = scalar_select 0, %s5, %s3
  $region1: #{tpu_custom_call.1} parent=0
    #allocation2 [shape = 'u8[8192]{0}', space=vmem, size = 0x2000, scoped, tag = 'input window, operand 0']
    #allocation3 [shape = 's32[2]{0}', space=sflag, size = 0x8, scoped, tag = 'scoped memory for tpu_custom_call.1']
    #allocation4 [shape = 's32[2]{0}', space=sflag, size = 0x8, scoped, tag = 'scoped memory for tpu_custom_call.1']
    #allocation5 [shape = 'u8[4096]{0}', space=vmem, size = 0x1000, scoped, tag = 'input window, operand 1, single buffered']
    #allocation6 [shape = 's32[1]{0}', space=sflag, size = 0x4, scoped, tag = 'scoped memory for tpu_custom_call.1']
    #allocation7 [shape = 'u8[8192]{0}', space=vmem, size = 0x2000, scoped, tag = 'output window, operand 0']
    %7 = vsyncpa [#allocation3], 0
    %s8 = scalar_lea.sflag [#allocation3], 1
    %9 = vsyncpa %s8, 0
    %10 = vsyncpa [#allocation6], 0
    %11 = vsyncpa [#allocation4], 0
    %s12 = scalar_lea.sflag [#allocation4], 1
    %13 = vsyncpa %s12, 0
    loop: start=0, step=1, limit=4
    $region2: #{tpu_custom_call.1} parent=1 // loop_pre_header
      _
    $region3: #{tpu_custom_call.1} parent=1 // loop_header
      %s15 = sphi 0, %s19
      %p16 = scmp.ge.s32.totalorder %s15, 4
      %s25 = sphi 0, %s27
      %s28 = sphi 0, %s25
      %s29 = sphi 0, %s28
      %s45 = sphi 0, %s29
      %s49 = sphi 0, %s49
      %s51 = sphi 0, %s49
      %s52 = sphi 0, %s51
      %s66 = sphi 0, %s52
      %s72 = sphi 0, %s74
      %s75 = sphi 0, %s72
      %s76 = sphi 0, %s75
      %s92 = sphi 0, %s76
    $region4: #{tpu_custom_call.1} parent=1 // loop_header_branch
      %18 = sbr.rel (%p16) target = $region8
    $region5: #{tpu_custom_call.1} parent=1 // loop_body
      %s20 = ssub.s32 %s15, 1
      %s21 = ssub.s32 %s15, 2
      %s22 = sadd.s32 %s15, 1
      %s23 = ssub.s32 %s15, %s22
      %p24 = scmp.eq.s32.totalorder %s23, 0
      %s26 = sadd.s32 %s25, 1
      %s27 = scalar_select %p24, %s25, %s26
      %p30 = pneg %p24
      %p31 = scmp.eq.s32.totalorder %s15, 1
      %p32 = por %p30, %p31
      %p33 = scmp.ne.s32.totalorder %s25, %s28
      %p34 = scmp.eq.s32.totalorder %s15, 0
      %p35 = por %p33, %p34
      %p36 = scmp.ne.s32.totalorder %s25, %s28
      %p37 = scmp.eq.s32.totalorder %s20, 1
      %p38 = por %p36, %p37
      %p39 = scmp.ne.s32.totalorder %s28, %s29
      %p40 = scmp.eq.s32.totalorder %s20, 0
      %p41 = por %p39, %p40
      %p42 = scmp.ne.s32.totalorder %s28, %s29
      %p43 = scmp.eq.s32.totalorder %s21, 1
      %p44 = por %p42, %p43
      %p46 = scmp.ne.s32.totalorder %s29, %s45
      %p47 = scmp.eq.s32.totalorder %s21, 0
      %p48 = por %p46, %p47
      %s50 = sadd.s32 %s49, 1
      %p53 = scmp.eq.s32.totalorder %s15, 1
      %p54 = scmp.ne.s32.totalorder %s49, %s51
      %p55 = scmp.eq.s32.totalorder %s15, 0
      %p56 = por %p54, %p55
      %p57 = scmp.ne.s32.totalorder %s49, %s51
      %p58 = scmp.eq.s32.totalorder %s20, 1
      %p59 = por %p57, %p58
      %p60 = scmp.ne.s32.totalorder %s51, %s52
      %p61 = scmp.eq.s32.totalorder %s20, 0
      %p62 = por %p60, %p61
      %p63 = scmp.ne.s32.totalorder %s51, %s52
      %p64 = scmp.eq.s32.totalorder %s21, 1
      %p65 = por %p63, %p64
      %p67 = scmp.ne.s32.totalorder %s52, %s66
      %p68 = scmp.eq.s32.totalorder %s21, 0
      %p69 = por %p67, %p68
      %s70 = ssub.s32 %s15, %s22
      %p71 = scmp.eq.s32.totalorder %s70, 0
      %s73 = sadd.s32 %s72, 1
      %s74 = scalar_select %p71, %s72, %s73
      %p77 = pneg %p71
      %p78 = scmp.eq.s32.totalorder %s15, 1
      %p79 = por %p77, %p78
      %p80 = scmp.ne.s32.totalorder %s72, %s75
      %p81 = scmp.eq.s32.totalorder %s15, 0
      %p82 = por %p80, %p81
      %p83 = scmp.ne.s32.totalorder %s72, %s75
      %p84 = scmp.eq.s32.totalorder %s20, 1
      %p85 = por %p83, %p84
      %p86 = scmp.ne.s32.totalorder %s75, %s76
      %p87 = scmp.eq.s32.totalorder %s20, 0
      %p88 = por %p86, %p87
      %p89 = scmp.ne.s32.totalorder %s75, %s76
      %p90 = scmp.eq.s32.totalorder %s21, 1
      %p91 = por %p89, %p90
      %p93 = scmp.ne.s32.totalorder %s76, %s92
      %p94 = scmp.eq.s32.totalorder %s21, 0
      %p95 = por %p93, %p94
      %p96 = scmp.le.s32.totalorder 1, %s15
      %p97 = scmp.lt.s32.totalorder %s15, 3
      %p98 = pnand %p96, %p97
      %p99 = pneg %p98
      // Predicated region
      $region9: #{tpu_custom_call.1} parent=5 // pred_check
        _
      $region10: #{tpu_custom_call.1} parent=5 // pred_check_branch
        %101 = sbr.rel (%p98) target = $region12
      $region11: #{tpu_custom_call.1} parent=5 // pred_region
        %s102 = ssub.s32 %s15, 1
        // Predicated region
        $region13: #{tpu_custom_call.1} parent=11 // pred_check
          %p103 = pneg %p62
        $region14: #{tpu_custom_call.1} parent=11 // pred_check_branch
          %105 = sbr.rel (%p103) target = $region16
        $region15: #{tpu_custom_call.1} parent=11 // pred_region
          %s107 = ssub.s32 128, 128
          %108 = vsyncadd [#allocation6], %s107
          %s110 = sshll.u32 [#allocation5], 4
          %s111 = int_to_ptr.vmem [resolvable:$true] %s110
          %113 = dma.hbm_to_vmem [thread:$0]  %s1, 128, %s111, [#allocation6]
        $region16: #{tpu_custom_call.1} parent=11 // pred_fallthru
          _
      $region12: #{tpu_custom_call.1} parent=5 // pred_fallthru
        _
      %p114 = scmp.lt.s32.totalorder %s15, 2
      // Predicated region
      $region17: #{tpu_custom_call.1} parent=5 // pred_check
        %p115 = pneg %p114
      $region18: #{tpu_custom_call.1} parent=5 // pred_check_branch
        %117 = sbr.rel (%p115) target = $region20
      $region19: #{tpu_custom_call.1} parent=5 // pred_region
        // Predicated region
        $region21: #{tpu_custom_call.1} parent=19 // pred_check
          %p118 = pneg %p35
        $region22: #{tpu_custom_call.1} parent=19 // pred_check_branch
          %120 = sbr.rel (%p118) target = $region24
        $region23: #{tpu_custom_call.1} parent=19 // pred_region
          %s121 = sand.u32 %s25, 1
          %s122 = scalar_lea.sflag [#allocation3], %s121
          %s123 = sand.u32 %s25, 1
          %s124 = smul.addr %s123, 8
          %s125 = scalar_lea.vmem [#allocation2], %s124
          %s127 = ssub.s32 128, 128
          %128 = vsyncadd %s122, %s127
          %s129 = smul.addr %s15, 128
          %s130 = scalar_lea.hbm %s0, %s129
          %s132 = sshll.u32 %s125, 4
          %s133 = int_to_ptr.vmem [resolvable:$true] %s132
          %135 = dma.hbm_to_vmem [thread:$0]  %s130, 128, %s133, %s122
        $region24: #{tpu_custom_call.1} parent=19 // pred_fallthru
          _
      $region20: #{tpu_custom_call.1} parent=5 // pred_fallthru
        _
      %p136 = scmp.le.s32.totalorder 1, %s15
      %p137 = scmp.lt.s32.totalorder %s15, 3
      %p138 = pnand %p136, %p137
      %p139 = pneg %p138
      // Predicated region
      $region25: #{tpu_custom_call.1} parent=5 // pred_check
        _
      $region26: #{tpu_custom_call.1} parent=5 // pred_check_branch
        %141 = sbr.rel (%p138) target = $region28
      $region27: #{tpu_custom_call.1} parent=5 // pred_region
        %s142 = ssub.s32 %s15, 1
        %s143 = sand.u32 %s28, 1
        %s144 = scalar_lea.sflag [#allocation3], %s143
        %s145 = sand.u32 %s28, 1
        %s146 = smul.addr %s145, 8
        %s147 = scalar_lea.vmem [#allocation2], %s146
        // Predicated region
        $region29: #{tpu_custom_call.1} parent=27 // pred_check
          %p148 = pneg %p41
        $region30: #{tpu_custom_call.1} parent=27 // pred_check_branch
          %150 = sbr.rel (%p148) target = $region32
        $region31: #{tpu_custom_call.1} parent=27 // pred_region
          %151 = dma.done %s144, 128
        $region32: #{tpu_custom_call.1} parent=27 // pred_fallthru
          _
        // Predicated region
        $region33: #{tpu_custom_call.1} parent=27 // pred_check
          %p152 = pneg %p62
        $region34: #{tpu_custom_call.1} parent=27 // pred_check_branch
          %154 = sbr.rel (%p152) target = $region36
        $region35: #{tpu_custom_call.1} parent=27 // pred_region
          %155 = dma.done [#allocation6], 128
        $region36: #{tpu_custom_call.1} parent=27 // pred_fallthru
          _
        %s156 = sand.u32 %s28, 1
        %s157 = scalar_lea.sflag [#allocation3], %s156
        %s158 = sand.u32 %s28, 1
        %s159 = smul.addr %s158, 8
        %s160 = scalar_lea.vmem [#allocation2], %s159
        %p161 = pneg %p41
        %p162 = pneg %p38
        %p163 = pneg %p62
        %p164 = pneg %p59
        %p165 = pneg %p88
        %p166 = pneg %p85
        %s167 = sand.u32 %s75, 1
        %s168 = scalar_lea.sflag [#allocation4], %s167
        %s169 = sand.u32 %s75, 1
        %s170 = smul.addr %s169, 8
        %s171 = scalar_lea.vmem [#allocation7], %s170
        %v172 = vld [vmem:[%s147] sm:$0xff]
        %v173 = vmul.f32 %v172, 5.656854
        %v174 = vld [vmem:[#allocation5] sm:$0xff]
        %v175 = vadd.f32 %v173, %v174
        %vm176 = vcmask 261120
        %177 = vst.msk [vmem:[%s171] sm:$0xff] %vm176, %v175
        %s178 = sand.u32 %s75, 1
        %s179 = scalar_lea.sflag [#allocation4], %s178
        %s180 = sand.u32 %s75, 1
        %s181 = smul.addr %s180, 8
        %s182 = scalar_lea.vmem [#allocation7], %s181
        // Predicated region
        $region37: #{tpu_custom_call.1} parent=27 // pred_check
          %p183 = pneg %p85
        $region38: #{tpu_custom_call.1} parent=27 // pred_check_branch
          %185 = sbr.rel (%p183) target = $region40
        $region39: #{tpu_custom_call.1} parent=27 // pred_region
          %s187 = ssub.s32 128, 128
          %188 = vsyncadd %s179, %s187
          %s189 = smul.addr %s20, 128
          %s190 = scalar_lea.hbm %s2, %s189
          %s192 = sshll.u32 %s182, 4
          %s193 = int_to_ptr.vmem [resolvable:$true] %s192
          %195 = dma.vmem_to_hbm [thread:$0]  %s193, 128, %s190, %s179
        $region40: #{tpu_custom_call.1} parent=27 // pred_fallthru
          _
      $region28: #{tpu_custom_call.1} parent=5 // pred_fallthru
        _
      %p196 = scmp.le.s32.totalorder 2, %s15
      // Predicated region
      $region41: #{tpu_custom_call.1} parent=5 // pred_check
        %p197 = pneg %p196
      $region42: #{tpu_custom_call.1} parent=5 // pred_check_branch
        %199 = sbr.rel (%p197) target = $region44
      $region43: #{tpu_custom_call.1} parent=5 // pred_region
        %s200 = ssub.s32 %s15, 2
        // Predicated region
        $region45: #{tpu_custom_call.1} parent=43 // pred_check
          %p201 = pneg %p91
        $region46: #{tpu_custom_call.1} parent=43 // pred_check_branch
          %203 = sbr.rel (%p201) target = $region48
        $region47: #{tpu_custom_call.1} parent=43 // pred_region
          %s204 = sand.u32 %s76, 1
          %s205 = scalar_lea.sflag [#allocation4], %s204
          %s206 = sand.u32 %s76, 1
          %s207 = smul.addr %s206, 8
          %s208 = scalar_lea.vmem [#allocation7], %s207
          %209 = dma.done %s205, 128
        $region48: #{tpu_custom_call.1} parent=43 // pred_fallthru
          _
      $region44: #{tpu_custom_call.1} parent=5 // pred_fallthru
        _
    $region6: #{tpu_custom_call.1} parent=1 // loop_footer
      %s19 = sadd.s32 1, %s15
    $region7: #{tpu_custom_call.1} parent=1 // loop_footer_branch
      %14 = sbr.rel target = $region3
    $region8: #{tpu_custom_call.1} parent=1 // loop_exit
      _
    %210 = vsyncpa [#allocation3], 1
    %s211 = scalar_lea.sflag [#allocation3], 1
    %212 = vsyncpa %s211, 1
    %213 = vsyncpa [#allocation6], 1
    %214 = vsyncpa [#allocation4], 1
    %s215 = scalar_lea.sflag [#allocation4], 1
    %216 = vsyncpa %s215, 1

</llo_original>
